<compile_context>
chip_gen: v7x
topology: tpu7x:2x2x1
jax: 0.10.0
libtpu: 0.0.40
codegen_flags: <defaults>
</compile_context>

<pallas_src>
import jax
import jax.numpy as jnp
from jax import lax
from jax.experimental import pallas as pl
from jax.experimental.pallas import tpu as pltpu


def becl_kernel(x_ref, w1_ref, wslab_ref, bslab_ref, o_ref):
    hidden = w1_ref.shape[0]       # hidden_dim
    feat = o_ref.shape[1]          # feature_dim

    # x: (tile_b, tau_dim) f32 -> bf16 for the MXU.  Batch stays on lanes for
    # every intermediate below (activations are (features, tile_b)).
    x = x_ref[...].astype(jnp.bfloat16)

    # Static slices out of the packed parameter slabs (offsets are multiples of
    # the sublane packing for hidden=32 / feat=16).
    w2 = wslab_ref[0:hidden, :]
    w34 = wslab_ref[hidden:2 * hidden, :]
    w5 = wslab_ref[2 * hidden:2 * hidden + feat, :]
    b1 = bslab_ref[0:hidden, :]
    b2 = bslab_ref[hidden:2 * hidden, :]
    b34 = bslab_ref[2 * hidden:3 * hidden, :]
    b5 = bslab_ref[3 * hidden:3 * hidden + feat, :]

    # embed layer 1: contract on x's LAST dim (no wrapper transpose needed).
    # (hidden, tau) x (tile, tau) -> (hidden, tile)
    h = lax.dot_general(w1_ref[...], x, (((1,), (1,)), ((), ())),
                        preferred_element_type=jnp.float32) + b1
    h = jnp.maximum(h, 0.0).astype(jnp.bfloat16)

    # embed layer 2
    h = jnp.dot(w2, h, preferred_element_type=jnp.float32) + b2
    h = jnp.maximum(h, 0.0).astype(jnp.bfloat16)

    # embed layer 3 + project_head layer 1, folded: w34 = w4 @ w3, b34 = w4@b3+b4
    p = jnp.dot(w34, h, preferred_element_type=jnp.float32) + b34
    p = jnp.maximum(p, 0.0).astype(jnp.bfloat16)

    # project_head layer 2 -> (feat, tile); transpose once so the store is in
    # the module's (batch, feature) layout (no wrapper-side transpose pass).
    out = jnp.dot(w5, p, preferred_element_type=jnp.float32) + b5
    o_ref[...] = out.T.astype(o_ref.dtype)


def pack_params(params):
    """One-time parameter prep, OUTSIDE the per-call hot path.

    * Fold embed's final Linear (w3, b3) into project_head's first Linear
      (w4, b4):  w34 = w4 @ w3,  b34 = w4 @ b3 + b4   (exact in real math).
    * Pre-cast weights to bf16 (MXU-native); keep biases f32.
    * Concatenate into two slabs so the kernel sees 3 parameter operands.
    """
    w34 = params["w4"] @ params["w3"]
    b34 = params["w4"] @ params["b3"] + params["b4"]
    wslab = jnp.concatenate(
        [params["w2"], w34, params["w5"]], axis=0).astype(jnp.bfloat16)
    bslab = jnp.concatenate(
        [params["b1"], params["b2"], b34, params["b5"]], axis=0).astype(jnp.float32)
    return {
        "w1": params["w1"].astype(jnp.bfloat16),   # (hidden, tau_dim)
        "wslab": wslab,                            # (2*hidden + feat, hidden) bf16
        "bslab": bslab,                            # (3*hidden + feat, 1) f32
    }


def becl_forward(tau, packed, *, max_tile=8192):
    """tau: (B, tau_dim) f32.  packed: output of pack_params."""
    B, tau_dim = tau.shape
    hidden = packed["w1"].shape[0]
    feat = packed["bslab"].shape[0] - 3 * hidden

    # Batch tile selection: minimum number of grid steps.
    #   * small/medium batch -> 1 step (one TC does it; per-step overhead once)
    #   * large batch        -> ~2 "parallel" steps so both v7x TCs get work,
    #                           tile capped at max_tile (VMEM per step is tiny).
    lane = 128
    b_lane = ((B + lane - 1) // lane) * lane
    if b_lane <= 2048:
        tile = b_lane
    else:
        half = ((b_lane + 2 * lane - 1) // (2 * lane)) * lane
        tile = min(half, max_tile)
    b_padded = ((b_lane + tile - 1) // tile) * tile
    grid = b_padded // tile

    # Explicit zero-padding of the batch dim (padded rows are sliced off below;
    # they cannot leak into valid rows since contraction is over features only).
    x = tau if b_padded == B else jnp.pad(tau, ((0, b_padded - B), (0, 0)))

    out = pl.pallas_call(
        becl_kernel,
        out_shape=jax.ShapeDtypeStruct((b_padded, feat), jnp.float32),
        grid_spec=pltpu.PrefetchScalarGridSpec(
            num_scalar_prefetch=0,
            grid=(grid,),
            in_specs=[
                # Input in its native (batch, tau_dim) layout, tiled on batch.
                pl.BlockSpec((tile, tau_dim), lambda i: (i, 0)),
                # Parameters: whole slabs resident in VMEM on every step.
                pl.BlockSpec(packed["w1"].shape, lambda i: (0, 0)),
                pl.BlockSpec(packed["wslab"].shape, lambda i: (0, 0)),
                pl.BlockSpec(packed["bslab"].shape, lambda i: (0, 0)),
            ],
            out_specs=pl.BlockSpec((tile, feat), lambda i: (i, 0)),
        ),
        compiler_params=pltpu.CompilerParams(
            dimension_semantics=("parallel",)),
    )(x, packed["w1"], packed["wslab"], packed["bslab"])

    return out if b_padded == B else out[:B]


def init_params(key, tau_dim, feature_dim, hidden_dim):
    """Deterministic synthetic init in PyTorch nn.Linear (out, in) layout."""
    # TODO(synk): original module uses utils.weight_init; replaced by synthetic init.
    dims = [
        ("w1", hidden_dim, tau_dim),
        ("w2", hidden_dim, hidden_dim),
        ("w3", feature_dim, hidden_dim),
        ("w4", hidden_dim, feature_dim),
        ("w5", feature_dim, hidden_dim),
    ]
    params = {}
    keys = jax.random.split(key, 2 * len(dims))
    for n, (name, d_out, d_in) in enumerate(dims):
        scale = 1.0 / jnp.sqrt(jnp.float32(d_in))
        params[name] = jax.random.normal(keys[2 * n], (d_out, d_in), jnp.float32) * scale
        params[name.replace("w", "b")] = (
            jax.random.normal(keys[2 * n + 1], (d_out, 1), jnp.float32) * 0.1)
    return params


def becl_reference(tau, p):
    """Pure-JAX reference mirroring the kernel's fold + bf16/f32 mixed precision."""
    w34 = p["w4"] @ p["w3"]
    b34 = p["w4"] @ p["b3"] + p["b4"]

    def layer(x_bf16, w, b, relu):
        y = jnp.dot(w.astype(jnp.bfloat16), x_bf16,
                    preferred_element_type=jnp.float32) + b
        return jnp.maximum(y, 0.0) if relu else y

    x = tau.T.astype(jnp.bfloat16)
    h = layer(x, p["w1"], p["b1"], True).astype(jnp.bfloat16)
    h = layer(h, p["w2"], p["b2"], True).astype(jnp.bfloat16)
    q = layer(h, w34, b34, True).astype(jnp.bfloat16)
    out = layer(q, p["w5"], p["b5"], False)
    return out.T


if __name__ == "__main__":
    tau_dim, feature_dim, hidden_dim = 24, 16, 32
    batch = 512  # single 512-lane grid step (one TC); large batches auto-split

    key = jax.random.PRNGKey(0)
    k_x, k_p = jax.random.split(key)
    tau = jax.random.normal(k_x, (batch, tau_dim), jnp.float32)
    params = init_params(k_p, tau_dim, feature_dim, hidden_dim)

    packed = pack_params(params)        # one-time prep, outside the hot path
    fwd = jax.jit(becl_forward)
    out = jax.block_until_ready(fwd(tau, packed))

    ref = becl_reference(tau, params)
    assert out.shape == (batch, feature_dim)
    max_err = float(jnp.max(jnp.abs(out - ref)))
    assert jnp.allclose(out, ref, atol=1e-2, rtol=1e-2), max_err

    print("KERNEL_OK")
</pallas_src>

<mosaic_0001>
module attributes {stable_mosaic.version = 11 : i64} {
  func.func @becl_kernel(%arg0: i32, %arg1: memref<512x24xf32, #tpu.memory_space<vmem>>, %arg2: memref<32x24xbf16, #tpu.memory_space<vmem>>, %arg3: memref<80x32xbf16, #tpu.memory_space<vmem>>, %arg4: memref<112x1xf32, #tpu.memory_space<vmem>>, %arg5: memref<512x16xf32, #tpu.memory_space<vmem>>) attributes {dimension_semantics = [#tpu.dimension_semantics<parallel>], iteration_bounds = array<i64: 1>, scalar_prefetch = 0 : i64, scratch_operands = 0 : i64, tpu.core_type = #tpu.core_type<tc>, window_params = [{transform_indices = @transform_0, window_bounds = array<i64: 512, 24>}, {pipeline_mode = #tpu.pipeline_mode<synchronous>, transform_indices = @transform_1, window_bounds = array<i64: 32, 24>}, {pipeline_mode = #tpu.pipeline_mode<synchronous>, transform_indices = @transform_2, window_bounds = array<i64: 80, 32>}, {pipeline_mode = #tpu.pipeline_mode<synchronous>, transform_indices = @transform_3, window_bounds = array<i64: 112, 1>}, {transform_indices = @transform_4, window_bounds = array<i64: 512, 16>}]} {
    %c0 = arith.constant 0 : index
    %c0_0 = arith.constant 0 : index
    %0 = vector.load %arg1[%c0, %c0_0] : memref<512x24xf32, #tpu.memory_space<vmem>>, vector<512x24xf32>
    %1 = arith.truncf %0 : vector<512x24xf32> to vector<512x24xbf16>
    %c0_1 = arith.constant 0 : index
    %c0_2 = arith.constant 0 : index
    %2 = vector.load %arg3[%c0_1, %c0_2] : memref<80x32xbf16, #tpu.memory_space<vmem>>, vector<32x32xbf16>
    %c32 = arith.constant 32 : index
    %c0_3 = arith.constant 0 : index
    %3 = vector.load %arg3[%c32, %c0_3] : memref<80x32xbf16, #tpu.memory_space<vmem>>, vector<32x32xbf16>
    %c64 = arith.constant 64 : index
    %c0_4 = arith.constant 0 : index
    %4 = vector.load %arg3[%c64, %c0_4] : memref<80x32xbf16, #tpu.memory_space<vmem>>, vector<16x32xbf16>
    %c0_5 = arith.constant 0 : index
    %c0_6 = arith.constant 0 : index
    %5 = vector.load %arg4[%c0_5, %c0_6] : memref<112x1xf32, #tpu.memory_space<vmem>>, vector<32x1xf32>
    %c32_7 = arith.constant 32 : index
    %c0_8 = arith.constant 0 : index
    %6 = vector.load %arg4[%c32_7, %c0_8] : memref<112x1xf32, #tpu.memory_space<vmem>>, vector<32x1xf32>
    %c64_9 = arith.constant 64 : index
    %c0_10 = arith.constant 0 : index
    %7 = vector.load %arg4[%c64_9, %c0_10] : memref<112x1xf32, #tpu.memory_space<vmem>>, vector<32x1xf32>
    %c96 = arith.constant 96 : index
    %c0_11 = arith.constant 0 : index
    %8 = vector.load %arg4[%c96, %c0_11] : memref<112x1xf32, #tpu.memory_space<vmem>>, vector<16x1xf32>
    %c0_12 = arith.constant 0 : index
    %c0_13 = arith.constant 0 : index
    %9 = vector.load %arg2[%c0_12, %c0_13] : memref<32x24xbf16, #tpu.memory_space<vmem>>, vector<32x24xbf16>
    %cst = arith.constant dense<0.000000e+00> : vector<32x512xf32>
    %10 = tpu.matmul %9, %1, %cst {dimension_numbers = #tpu.dot_dimension_numbers<[1], [1], [0], [0], [0, 0, 1, 0], [], []>} : vector<32x24xbf16>, vector<512x24xbf16>, vector<32x512xf32> -> vector<32x512xf32>
    %11 = vector.broadcast %5 : vector<32x1xf32> to vector<32x512xf32>
    %12 = arith.addf %10, %11 : vector<32x512xf32>
    %cst_14 = arith.constant 0.000000e+00 : f32
    %13 = vector.broadcast %cst_14 : f32 to vector<32x512xf32>
    %14 = arith.maximumf %12, %13 : vector<32x512xf32>
    %15 = arith.truncf %14 : vector<32x512xf32> to vector<32x512xbf16>
    %cst_15 = arith.constant dense<0.000000e+00> : vector<32x512xf32>
    %16 = tpu.matmul %2, %15, %cst_15 {dimension_numbers = #tpu.dot_dimension_numbers<[1], [0], [0], [1], [0, 0, 1, 1], [], []>} : vector<32x32xbf16>, vector<32x512xbf16>, vector<32x512xf32> -> vector<32x512xf32>
    %17 = vector.broadcast %6 : vector<32x1xf32> to vector<32x512xf32>
    %18 = arith.addf %16, %17 : vector<32x512xf32>
    %cst_16 = arith.constant 0.000000e+00 : f32
    %19 = vector.broadcast %cst_16 : f32 to vector<32x512xf32>
    %20 = arith.maximumf %18, %19 : vector<32x512xf32>
    %21 = arith.truncf %20 : vector<32x512xf32> to vector<32x512xbf16>
    %cst_17 = arith.constant dense<0.000000e+00> : vector<32x512xf32>
    %22 = tpu.matmul %3, %21, %cst_17 {dimension_numbers = #tpu.dot_dimension_numbers<[1], [0], [0], [1], [0, 0, 1, 1], [], []>} : vector<32x32xbf16>, vector<32x512xbf16>, vector<32x512xf32> -> vector<32x512xf32>
    %23 = vector.broadcast %7 : vector<32x1xf32> to vector<32x512xf32>
    %24 = arith.addf %22, %23 : vector<32x512xf32>
    %cst_18 = arith.constant 0.000000e+00 : f32
    %25 = vector.broadcast %cst_18 : f32 to vector<32x512xf32>
    %26 = arith.maximumf %24, %25 : vector<32x512xf32>
    %27 = arith.truncf %26 : vector<32x512xf32> to vector<32x512xbf16>
    %cst_19 = arith.constant dense<0.000000e+00> : vector<16x512xf32>
    %28 = tpu.matmul %4, %27, %cst_19 {dimension_numbers = #tpu.dot_dimension_numbers<[1], [0], [0], [1], [0, 0, 1, 1], [], []>} : vector<16x32xbf16>, vector<32x512xbf16>, vector<16x512xf32> -> vector<16x512xf32>
    %29 = vector.broadcast %8 : vector<16x1xf32> to vector<16x512xf32>
    %30 = arith.addf %28, %29 : vector<16x512xf32>
    %31 = tpu.transpose %30, [1, 0] : vector<16x512xf32> -> vector<512x16xf32>
    %c0_20 = arith.constant 0 : index
    %c0_21 = arith.constant 0 : index
    %32 = vector.load %arg5[%c0_20, %c0_21] : memref<512x16xf32, #tpu.memory_space<vmem>>, vector<512x16xf32>
    tpu.vector_store %arg5[%c0_20, %c0_21], %31 {strides = array<i32>} : memref<512x16xf32, #tpu.memory_space<vmem>>, vector<512x16xf32>,
    return
  }
  func.func @transform_0(%arg0: i32) -> (i32, i32) {
    %c0_i32 = arith.constant 0 : i32
    %c0_i32_0 = arith.constant 0 : i32
    return %arg0, %c0_i32 : i32, i32
  }
  func.func @transform_1(%arg0: i32) -> (i32, i32) {
    %c0_i32 = arith.constant 0 : i32
    %c0_i32_0 = arith.constant 0 : i32
    %c0_i32_1 = arith.constant 0 : i32
    return %c0_i32, %c0_i32_0 : i32, i32
  }
  func.func @transform_2(%arg0: i32) -> (i32, i32) {
    %c0_i32 = arith.constant 0 : i32
    %c0_i32_0 = arith.constant 0 : i32
    %c0_i32_1 = arith.constant 0 : i32
    return %c0_i32, %c0_i32_0 : i32, i32
  }
  func.func @transform_3(%arg0: i32) -> (i32, i32) {
    %c0_i32 = arith.constant 0 : i32
    %c0_i32_0 = arith.constant 0 : i32
    %c0_i32_1 = arith.constant 0 : i32
    return %c0_i32, %c0_i32_0 : i32, i32
  }
  func.func @transform_4(%arg0: i32) -> (i32, i32) {
    %c0_i32 = arith.constant 0 : i32
    %c0_i32_0 = arith.constant 0 : i32
    return %arg0, %c0_i32 : i32, i32
  }
}

</mosaic_0001>

<llo_original>
// kernel: becl_forward.1
$region0: #{becl_forward.1}
  #allocation0 [shape = 'u32[]', space=smem, size = 0x4, offset = 0x4, fixed_abs, tag = 'smem constant byte address 0x4 - core index']
  #allocation1 [shape = 'u32[144,128]{1,0:T(1,128)}', space=vmem, size = 0x12000, scoped, tag = 'internal scratch']
  %s0 = inlined_call_operand.vmem [shape: f32[512,24], index: 0, kind: input, shape index: {}]
  %s1 = inlined_call_operand.vmem [shape: bf16[32,24], index: 1, kind: input, shape index: {}]
  %s2 = inlined_call_operand.vmem [shape: bf16[80,32], index: 2, kind: input, shape index: {}]
  %s3 = inlined_call_operand.vmem [shape: f32[112,1], index: 3, kind: input, shape index: {}]
  %s4 = inlined_call_operand.vmem [shape: f32[512,16], index: 4, kind: output, shape index: {}]
  %s5 = sld [smem:[#allocation0]]
  $region26: #{becl_forward.1} parent=0
    _
  %s7 = ssub.s32 1, %s5
  %s8 = scalar_select 0, %s7, %s5
  // Predicated region
  $region2: #{becl_forward.1} parent=0 // pred_check
    _
  $region3: #{becl_forward.1} parent=0 // pred_check_branch
    %10 = sbr.rel (0) target = $region5
  $region4: #{becl_forward.1} parent=0 // pred_region
    _
  $region5: #{becl_forward.1} parent=0 // pred_fallthru
    _
  // Predicated region
  $region6: #{becl_forward.1} parent=0 // pred_check
    _
  $region7: #{becl_forward.1} parent=0 // pred_check_branch
    %12 = sbr.rel (0) target = $region9
  $region8: #{becl_forward.1} parent=0 // pred_region
    _
  $region9: #{becl_forward.1} parent=0 // pred_fallthru
    _
  // Predicated region
  $region10: #{becl_forward.1} parent=0 // pred_check
    _
  $region11: #{becl_forward.1} parent=0 // pred_check_branch
    %14 = sbr.rel (0) target = $region13
  $region12: #{becl_forward.1} parent=0 // pred_region
    _
  $region13: #{becl_forward.1} parent=0 // pred_fallthru
    _
  // Predicated region
  $region14: #{becl_forward.1} parent=0 // pred_check
    _
  $region15: #{becl_forward.1} parent=0 // pred_check_branch
    %16 = sbr.rel (0) target = $region17
  $region16: #{becl_forward.1} parent=0 // pred_region
    _
  $region17: #{becl_forward.1} parent=0 // pred_fallthru
    _
  %v18 = vld [vmem:[%s0] sm:$0xff]
  %v19 = vld [vmem:[%s0 + $0x8] sm:$0xff]
  %v20 = vld [vmem:[%s0 + $0x10] sm:$0xff]
  %v21 = vld [vmem:[%s0 + $0x18] sm:$0xff]
  %v22 = vld [vmem:[%s0 + $0x20] sm:$0xff]
  %v23 = vld [vmem:[%s0 + $0x28] sm:$0xff]
  %v24 = vld [vmem:[%s0 + $0x30] sm:$0xff]
  %v25 = vld [vmem:[%s0 + $0x38] sm:$0xff]
  %v26 = vld [vmem:[%s0 + $0x40] sm:$0xff]
  %v27 = vld [vmem:[%s0 + $0x48] sm:$0xff]
  %v28 = vld [vmem:[%s0 + $0x50] sm:$0xff]
  %v29 = vld [vmem:[%s0 + $0x58] sm:$0xff]
  %v30 = vld [vmem:[%s0 + $0x60] sm:$0xff]
  %v31 = vld [vmem:[%s0 + $0x68] sm:$0xff]
  %v32 = vld [vmem:[%s0 + $0x70] sm:$0xff]
  %v33 = vld [vmem:[%s0 + $0x78] sm:$0xff]
  %v34 = vld [vmem:[%s0 + $0x80] sm:$0xff]
  %v35 = vld [vmem:[%s0 + $0x88] sm:$0xff]
  %v36 = vld [vmem:[%s0 + $0x90] sm:$0xff]
  %v37 = vld [vmem:[%s0 + $0x98] sm:$0xff]
  %v38 = vld [vmem:[%s0 + $0xa0] sm:$0xff]
  %v39 = vld [vmem:[%s0 + $0xa8] sm:$0xff]
  %v40 = vld [vmem:[%s0 + $0xb0] sm:$0xff]
  %v41 = vld [vmem:[%s0 + $0xb8] sm:$0xff]
  %v42 = vld [vmem:[%s0 + $0xc0] sm:$0xff]
  %v43 = vld [vmem:[%s0 + $0xc8] sm:$0xff]
  %v44 = vld [vmem:[%s0 + $0xd0] sm:$0xff]
  %v45 = vld [vmem:[%s0 + $0xd8] sm:$0xff]
  %v46 = vld [vmem:[%s0 + $0xe0] sm:$0xff]
  %v47 = vld [vmem:[%s0 + $0xe8] sm:$0xff]
  %v48 = vld [vmem:[%s0 + $0xf0] sm:$0xff]
  %v49 = vld [vmem:[%s0 + $0xf8] sm:$0xff]
  %v50 = vld [vmem:[%s0 + $0x100] sm:$0xff]
  %v51 = vld [vmem:[%s0 + $0x108] sm:$0xff]
  %v52 = vld [vmem:[%s0 + $0x110] sm:$0xff]
  %v53 = vld [vmem:[%s0 + $0x118] sm:$0xff]
  %v54 = vld [vmem:[%s0 + $0x120] sm:$0xff]
  %v55 = vld [vmem:[%s0 + $0x128] sm:$0xff]
  %v56 = vld [vmem:[%s0 + $0x130] sm:$0xff]
  %v57 = vld [vmem:[%s0 + $0x138] sm:$0xff]
  %v58 = vld [vmem:[%s0 + $0x140] sm:$0xff]
  %v59 = vld [vmem:[%s0 + $0x148] sm:$0xff]
  %v60 = vld [vmem:[%s0 + $0x150] sm:$0xff]
  %v61 = vld [vmem:[%s0 + $0x158] sm:$0xff]
  %v62 = vld [vmem:[%s0 + $0x160] sm:$0xff]
  %v63 = vld [vmem:[%s0 + $0x168] sm:$0xff]
  %v64 = vld [vmem:[%s0 + $0x170] sm:$0xff]
  %v65 = vld [vmem:[%s0 + $0x178] sm:$0xff]
  %v66 = vld [vmem:[%s0 + $0x180] sm:$0xff]
  %v67 = vld [vmem:[%s0 + $0x188] sm:$0xff]
  %v68 = vld [vmem:[%s0 + $0x190] sm:$0xff]
  %v69 = vld [vmem:[%s0 + $0x198] sm:$0xff]
  %v70 = vld [vmem:[%s0 + $0x1a0] sm:$0xff]
  %v71 = vld [vmem:[%s0 + $0x1a8] sm:$0xff]
  %v72 = vld [vmem:[%s0 + $0x1b0] sm:$0xff]
  %v73 = vld [vmem:[%s0 + $0x1b8] sm:$0xff]
  %v74 = vld [vmem:[%s0 + $0x1c0] sm:$0xff]
  %v75 = vld [vmem:[%s0 + $0x1c8] sm:$0xff]
  %v76 = vld [vmem:[%s0 + $0x1d0] sm:$0xff]
  %v77 = vld [vmem:[%s0 + $0x1d8] sm:$0xff]
  %v78 = vld [vmem:[%s0 + $0x1e0] sm:$0xff]
  %v79 = vld [vmem:[%s0 + $0x1e8] sm:$0xff]
  %v80 = vld [vmem:[%s0 + $0x1f0] sm:$0xff]
  %v81 = vld [vmem:[%s0 + $0x1f8] sm:$0xff]
  %v82 = vpack.c.bf16 %v19, %v18
  %v83 = vpack.c.bf16 %v21, %v20
  %v84 = vpack.c.bf16 %v23, %v22
  %v85 = vpack.c.bf16 %v25, %v24
  %v86 = vpack.c.bf16 %v27, %v26
  %v87 = vpack.c.bf16 %v29, %v28
  %v88 = vpack.c.bf16 %v31, %v30
  %v89 = vpack.c.bf16 %v33, %v32
  %v90 = vpack.c.bf16 %v35, %v34
  %v91 = vpack.c.bf16 %v37, %v36
  %v92 = vpack.c.bf16 %v39, %v38
  %v93 = vpack.c.bf16 %v41, %v40
  %v94 = vpack.c.bf16 %v43, %v42
  %v95 = vpack.c.bf16 %v45, %v44
  %v96 = vpack.c.bf16 %v47, %v46
  %v97 = vpack.c.bf16 %v49, %v48
  %v98 = vpack.c.bf16 %v51, %v50
  %v99 = vpack.c.bf16 %v53, %v52
  %v100 = vpack.c.bf16 %v55, %v54
  %v101 = vpack.c.bf16 %v57, %v56
  %v102 = vpack.c.bf16 %v59, %v58
  %v103 = vpack.c.bf16 %v61, %v60
  %v104 = vpack.c.bf16 %v63, %v62
  %v105 = vpack.c.bf16 %v65, %v64
  %v106 = vpack.c.bf16 %v67, %v66
  %v107 = vpack.c.bf16 %v69, %v68
  %v108 = vpack.c.bf16 %v71, %v70
  %v109 = vpack.c.bf16 %v73, %v72
  %v110 = vpack.c.bf16 %v75, %v74
  %v111 = vpack.c.bf16 %v77, %v76
  %v112 = vpack.c.bf16 %v79, %v78
  %v113 = vpack.c.bf16 %v81, %v80
  %v114 = vld [vmem:[%s2] sm:$0xf]
  %v115 = vld [vmem:[%s2 + $0x4] sm:$0xf]
  %v116 = vld [vmem:[%s2 + $0x8] sm:$0xf]
  %v117 = vld [vmem:[%s2 + $0xc] sm:$0xf]
  %v118 = vld [vmem:[%s2 + $0x10] sm:$0xf]
  %v119 = vld [vmem:[%s2 + $0x14] sm:$0xf]
  %v120 = vld [vmem:[%s2 + $0x18] sm:$0xf]
  %v121 = vld [vmem:[%s2 + $0x1c] sm:$0xf]
  %v122 = vld [vmem:[%s2 + $0x20] sm:$0xf]
  %v123 = vld [vmem:[%s2 + $0x24] sm:$0xf]
  %v124 = vld [vmem:[%s3] sm:$0xff]
  %v125 = vld [vmem:[%s3 + $0x8] sm:$0xff]
  %v126 = vld [vmem:[%s3 + $0x10] sm:$0xff]
  %v127 = vld [vmem:[%s3 + $0x18] sm:$0xff]
  %v128 = vld [vmem:[%s3 + $0x20] sm:$0xff]
  %v129 = vld [vmem:[%s3 + $0x28] sm:$0xff]
  %v130 = vld [vmem:[%s3 + $0x30] sm:$0xff]
  %v131 = vld [vmem:[%s3 + $0x38] sm:$0xff]
  %v132 = vld [vmem:[%s3 + $0x40] sm:$0xff]
  %v133 = vld [vmem:[%s3 + $0x48] sm:$0xff]
  %v134 = vld [vmem:[%s3 + $0x50] sm:$0xff]
  %v135 = vld [vmem:[%s3 + $0x58] sm:$0xff]
  %v136 = vld [vmem:[%s3 + $0x60] sm:$0xff]
  %v137 = vld [vmem:[%s3 + $0x68] sm:$0xff]
  %v138 = vld [vmem:[%s1] sm:$0xf]
  %v139 = vld [vmem:[%s1 + $0x4] sm:$0xf]
  %v140 = vld [vmem:[%s1 + $0x8] sm:$0xf]
  %v141 = vld [vmem:[%s1 + $0xc] sm:$0xf]
  %143 = vset.pattern.permute.xlu0 0
  %144 = vperm.xlu0 %143, %v124
  %v145 = vpop.permute.xlu0 %144
  %148 = vset.pattern.permute.xlu0 0
  %149 = vperm.xlu0 %148, %v125
  %v150 = vpop.permute.xlu0 %149
  %153 = vset.pattern.permute.xlu0 0
  %154 = vperm.xlu0 %153, %v126
  %v155 = vpop.permute.xlu0 %154
  %158 = vset.pattern.permute.xlu0 0
  %159 = vperm.xlu0 %158, %v127
  %v160 = vpop.permute.xlu0 %159
  %v166 = vunpack.c.l.b16 %v138
  %v167 = vunpack.c.l.b16 %v139
  %v168 = vunpack.c.l.b16 %v140
  %v169 = vunpack.c.l.b16 %v141
  %v170 = vpack.c.b16 %v167, %v166
  %v171 = vpack.c.b16 %v169, %v168
  %vm172 = vcmask 195584
  %v174 = vsel %vm172, %v170, 0
  %v177 = vsel %vm172, %v171, 0
  %v180 = vsel %vm172, %v82, 0
  %v183 = vsel %vm172, %v83, 0
  %v186 = vsel %vm172, %v84, 0
  %v189 = vsel %vm172, %v85, 0
  %v192 = vsel %vm172, %v86, 0
  %v195 = vsel %vm172, %v87, 0
  %v198 = vsel %vm172, %v88, 0
  %v201 = vsel %vm172, %v89, 0
  %v204 = vsel %vm172, %v90, 0
  %v207 = vsel %vm172, %v91, 0
  %v210 = vsel %vm172, %v92, 0
  %v213 = vsel %vm172, %v93, 0
  %v216 = vsel %vm172, %v94, 0
  %v219 = vsel %vm172, %v95, 0
  %v222 = vsel %vm172, %v96, 0
  %v225 = vsel %vm172, %v97, 0
  %v228 = vsel %vm172, %v98, 0
  %v231 = vsel %vm172, %v99, 0
  %v234 = vsel %vm172, %v100, 0
  %v237 = vsel %vm172, %v101, 0
  %v240 = vsel %vm172, %v102, 0
  %v243 = vsel %vm172, %v103, 0
  %v246 = vsel %vm172, %v104, 0
  %v249 = vsel %vm172, %v105, 0
  %v252 = vsel %vm172, %v106, 0
  %v255 = vsel %vm172, %v107, 0
  %v258 = vsel %vm172, %v108, 0
  %v261 = vsel %vm172, %v109, 0
  %v264 = vsel %vm172, %v110, 0
  %v267 = vsel %vm172, %v111, 0
  %v270 = vsel %vm172, %v112, 0
  %v273 = vsel %vm172, %v113, 0
  %275 = vmatprep.subr.bf16.mxu0 0
  %276 = vmatpush1.bf16.xpose.msra.mxu0 %v180
  %277 = vmatprep.subr.bf16.mxu0 0
  %278 = vmatpush1.bf16.xpose.msra.mxu0 %v183
  %279 = vmatprep.subr.bf16.mxu0 0
  %280 = vmatpush1.bf16.xpose.msra.mxu0 %v186
  %281 = vmatprep.subr.bf16.mxu0 0
  %282 = vmatpush1.bf16.xpose.msra.mxu0 %v189
  %283 = vmatprep.subr.bf16.mxu0 0
  %284 = vmatpush1.bf16.xpose.msra.mxu0 %v192
  %285 = vmatprep.subr.bf16.mxu0 0
  %286 = vmatpush1.bf16.xpose.msra.mxu0 %v195
  %287 = vmatprep.subr.bf16.mxu0 0
  %288 = vmatpush1.bf16.xpose.msra.mxu0 %v198
  %289 = vmatprep.subr.bf16.mxu0 0
  %290 = vmatpush1.bf16.xpose.msra.mxu0 %v201
  %291 = vmatprep.subr.bf16.mxu0 0
  %292 = vmatpush1.bf16.xpose.msra.mxu0 %v204
  %293 = vmatprep.subr.bf16.mxu0 0
  %294 = vmatpush1.bf16.xpose.msra.mxu0 %v207
  %295 = vmatprep.subr.bf16.mxu0 0
  %296 = vmatpush1.bf16.xpose.msra.mxu0 %v210
  %297 = vmatprep.subr.bf16.mxu0 0
  %298 = vmatpush1.bf16.xpose.msra.mxu0 %v213
  %299 = vmatprep.subr.bf16.mxu0 0
  %300 = vmatpush1.bf16.xpose.msra.mxu0 %v216
  %301 = vmatprep.subr.bf16.mxu0 0
  %302 = vmatpush1.bf16.xpose.msra.mxu0 %v219
  %303 = vmatprep.subr.bf16.mxu0 0
  %304 = vmatpush1.bf16.xpose.msra.mxu0 %v222
  %305 = vmatprep.subr.bf16.mxu0 0
  %306 = vmatpush1.bf16.xpose.msra.mxu0 %v225
  %307 = vmatprep.mubr.bf16.mxu0 0
  %308 = vmatmul.mubr.bf16.gmra.mrb[0].mxu0 %v174
  %v309 = vpop.f32.mrb[0].mxu0
  %v310 = vadd.f32 %v145, %v309
  %v311 = vpop.f32.mrb[0].mxu0
  %v312 = vadd.f32 %v145, %v311
  %v313 = vpop.f32.mrb[0].mxu0
  %v314 = vadd.f32 %v150, %v313
  %v315 = vpop.f32.mrb[0].mxu0
  %v316 = vadd.f32 %v150, %v315
  %317 = vmatprep.mubr.bf16.mxu0 0
  %318 = vmatmul.mubr.bf16.gmra.mrb[0].mxu0 %v177
  %v319 = vpop.f32.mrb[0].mxu0
  %v320 = vadd.f32 %v155, %v319
  %v321 = vpop.f32.mrb[0].mxu0
  %v322 = vadd.f32 %v155, %v321
  %v323 = vpop.f32.mrb[0].mxu0
  %v324 = vadd.f32 %v160, %v323
  %v325 = vpop.f32.mrb[0].mxu0
  %v326 = vadd.f32 %v160, %v325
  %327 = vdwg.mxu0
  %328 = vmatprep.subr.bf16.mxu0 0
  %329 = vmatpush1.bf16.xpose.msra.mxu0 %v228
  %330 = vmatprep.subr.bf16.mxu0 0
  %331 = vmatpush1.bf16.xpose.msra.mxu0 %v231
  %332 = vmatprep.subr.bf16.mxu0 0
  %333 = vmatpush1.bf16.xpose.msra.mxu0 %v234
  %334 = vmatprep.subr.bf16.mxu0 0
  %335 = vmatpush1.bf16.xpose.msra.mxu0 %v237
  %336 = vmatprep.subr.bf16.mxu0 0
  %337 = vmatpush1.bf16.xpose.msra.mxu0 %v240
  %338 = vmatprep.subr.bf16.mxu0 0
  %339 = vmatpush1.bf16.xpose.msra.mxu0 %v243
  %340 = vmatprep.subr.bf16.mxu0 0
  %341 = vmatpush1.bf16.xpose.msra.mxu0 %v246
  %342 = vmatprep.subr.bf16.mxu0 0
  %343 = vmatpush1.bf16.xpose.msra.mxu0 %v249
  %344 = vmatprep.subr.bf16.mxu0 0
  %345 = vmatpush1.bf16.xpose.msra.mxu0 %v252
  %346 = vmatprep.subr.bf16.mxu0 0
  %347 = vmatpush1.bf16.xpose.msra.mxu0 %v255
  %348 = vmatprep.subr.bf16.mxu0 0
  %349 = vmatpush1.bf16.xpose.msra.mxu0 %v258
  %350 = vmatprep.subr.bf16.mxu0 0
  %351 = vmatpush1.bf16.xpose.msra.mxu0 %v261
  %352 = vmatprep.subr.bf16.mxu0 0
  %353 = vmatpush1.bf16.xpose.msra.mxu0 %v264
  %354 = vmatprep.subr.bf16.mxu0 0
  %355 = vmatpush1.bf16.xpose.msra.mxu0 %v267
  %356 = vmatprep.subr.bf16.mxu0 0
  %357 = vmatpush1.bf16.xpose.msra.mxu0 %v270
  %358 = vmatprep.subr.bf16.mxu0 0
  %359 = vmatpush1.bf16.xpose.msra.mxu0 %v273
  %360 = vmatprep.mubr.bf16.mxu0 0
  %361 = vmatmul.mubr.bf16.gmra.mrb[0].mxu0 %v174
  %v362 = vpop.f32.mrb[0].mxu0
  %v363 = vadd.f32 %v145, %v362
  %v364 = vpop.f32.mrb[0].mxu0
  %v365 = vadd.f32 %v145, %v364
  %v366 = vpop.f32.mrb[0].mxu0
  %v367 = vadd.f32 %v150, %v366
  %v368 = vpop.f32.mrb[0].mxu0
  %v369 = vadd.f32 %v150, %v368
  %370 = vmatprep.mubr.bf16.mxu0 0
  %371 = vmatmul.mubr.bf16.gmra.mrb[0].mxu0 %v177
  %v372 = vpop.f32.mrb[0].mxu0
  %v373 = vadd.f32 %v155, %v372
  %v374 = vpop.f32.mrb[0].mxu0
  %v375 = vadd.f32 %v155, %v374
  %v376 = vpop.f32.mrb[0].mxu0
  %v377 = vadd.f32 %v160, %v376
  %v378 = vpop.f32.mrb[0].mxu0
  %v379 = vadd.f32 %v160, %v378
  %380 = vdwg.mxu0
  %v381 = vmax.f32 %v310, 0.0
  %v382 = vmax.f32 %v312, 0.0
  %v383 = vmax.f32 %v363, 0.0
  %v384 = vmax.f32 %v365, 0.0
  %v385 = vmax.f32 %v314, 0.0
  %v386 = vmax.f32 %v316, 0.0
  %v387 = vmax.f32 %v367, 0.0
  %v388 = vmax.f32 %v369, 0.0
  %v389 = vmax.f32 %v320, 0.0
  %v390 = vmax.f32 %v322, 0.0
  %v391 = vmax.f32 %v373, 0.0
  %v392 = vmax.f32 %v375, 0.0
  %v393 = vmax.f32 %v324, 0.0
  %v394 = vmax.f32 %v326, 0.0
  %v395 = vmax.f32 %v377, 0.0
  %v396 = vmax.f32 %v379, 0.0
  %v397 = vpack.c.bf16 %v385, %v381
  %v398 = vpack.c.bf16 %v386, %v382
  %v399 = vpack.c.bf16 %v387, %v383
  %v400 = vpack.c.bf16 %v388, %v384
  %v401 = vpack.c.bf16 %v393, %v389
  %v402 = vpack.c.bf16 %v394, %v390
  %v403 = vpack.c.bf16 %v395, %v391
  %v404 = vpack.c.bf16 %v396, %v392
  %406 = vset.pattern.permute.xlu0 0
  %407 = vperm.xlu0 %406, %v128
  %v408 = vpop.permute.xlu0 %407
  %411 = vset.pattern.permute.xlu0 0
  %412 = vperm.xlu0 %411, %v129
  %v413 = vpop.permute.xlu0 %412
  %416 = vset.pattern.permute.xlu0 0
  %417 = vperm.xlu0 %416, %v130
  %v418 = vpop.permute.xlu0 %417
  %421 = vset.pattern.permute.xlu0 0
  %422 = vperm.xlu0 %421, %v131
  %v423 = vpop.permute.xlu0 %422
  %v429 = vunpack.c.l.b16 %v114
  %v430 = vunpack.c.l.b16 %v115
  %v431 = vunpack.c.l.b16 %v116
  %v432 = vunpack.c.l.b16 %v117
  %v433 = vpack.c.b16 %v430, %v429
  %v434 = vpack.c.b16 %v432, %v431
  %vm435 = vcmask 261120
  %v437 = vsel %vm435, %v433, 0
  %v440 = vsel %vm435, %v434, 0
  %442 = vmatprep.subr.bf16.mxu0 %v398
  %443 = vmatpush1.bf16.msra.mxu0 %v397
  %444 = vmatprep.subr.bf16.mxu0 %v402
  %445 = vmatpush1.bf16.msra.mxu0 %v401
  %446 = vmatprep.subr.bf16.mxu0 0
  %447 = vmatpush1.bf16.msra.mxu0 0
  %448 = vmatprep.subr.bf16.mxu0 0
  %449 = vmatpush1.bf16.msra.mxu0 0
  %450 = vmatprep.subr.bf16.mxu0 0
  %451 = vmatpush1.bf16.msra.mxu0 0
  %452 = vmatprep.subr.bf16.mxu0 0
  %453 = vmatpush1.bf16.msra.mxu0 0
  %454 = vmatprep.subr.bf16.mxu0 0
  %455 = vmatpush1.bf16.msra.mxu0 0
  %456 = vmatprep.subr.bf16.mxu0 0
  %457 = vmatpush1.bf16.msra.mxu0 0
  %458 = vmatprep.subr.bf16.mxu0 0
  %459 = vmatpush1.bf16.msra.mxu0 0
  %460 = vmatprep.subr.bf16.mxu0 0
  %461 = vmatpush1.bf16.msra.mxu0 0
  %462 = vmatprep.subr.bf16.mxu0 0
  %463 = vmatpush1.bf16.msra.mxu0 0
  %464 = vmatprep.subr.bf16.mxu0 0
  %465 = vmatpush1.bf16.msra.mxu0 0
  %466 = vmatprep.subr.bf16.mxu0 0
  %467 = vmatpush1.bf16.msra.mxu0 0
  %468 = vmatprep.subr.bf16.mxu0 0
  %469 = vmatpush1.bf16.msra.mxu0 0
  %470 = vmatprep.subr.bf16.mxu0 0
  %471 = vmatpush1.bf16.msra.mxu0 0
  %472 = vmatprep.subr.bf16.mxu0 0
  %473 = vmatpush1.bf16.msra.mxu0 0
  %474 = vmatprep.mubr.bf16.mxu0 0
  %475 = vmatmul.mubr.bf16.gmra.mrb[0].mxu0 %v437
  %v476 = vpop.f32.mrb[0].mxu0
  %v477 = vadd.f32 %v408, %v476
  %v478 = vpop.f32.mrb[0].mxu0
  %v479 = vadd.f32 %v408, %v478
  %v480 = vpop.f32.mrb[0].mxu0
  %v481 = vadd.f32 %v413, %v480
  %v482 = vpop.f32.mrb[0].mxu0
  %v483 = vadd.f32 %v413, %v482
  %484 = vmatprep.mubr.bf16.mxu0 0
  %485 = vmatmul.mubr.bf16.gmra.mrb[0].mxu0 %v440
  %v486 = vpop.f32.mrb[0].mxu0
  %v487 = vadd.f32 %v418, %v486
  %v488 = vpop.f32.mrb[0].mxu0
  %v489 = vadd.f32 %v418, %v488
  %v490 = vpop.f32.mrb[0].mxu0
  %v491 = vadd.f32 %v423, %v490
  %v492 = vpop.f32.mrb[0].mxu0
  %v493 = vadd.f32 %v423, %v492
  %494 = vdwg.mxu0
  %495 = vmatprep.subr.bf16.mxu0 %v400
  %496 = vmatpush1.bf16.msra.mxu0 %v399
  %497 = vmatprep.subr.bf16.mxu0 %v404
  %498 = vmatpush1.bf16.msra.mxu0 %v403
  %499 = vmatprep.subr.bf16.mxu0 0
  %500 = vmatpush1.bf16.msra.mxu0 0
  %501 = vmatprep.subr.bf16.mxu0 0
  %502 = vmatpush1.bf16.msra.mxu0 0
  %503 = vmatprep.subr.bf16.mxu0 0
  %504 = vmatpush1.bf16.msra.mxu0 0
  %505 = vmatprep.subr.bf16.mxu0 0
  %506 = vmatpush1.bf16.msra.mxu0 0
  %507 = vmatprep.subr.bf16.mxu0 0
  %508 = vmatpush1.bf16.msra.mxu0 0
  %509 = vmatprep.subr.bf16.mxu0 0
  %510 = vmatpush1.bf16.msra.mxu0 0
  %511 = vmatprep.subr.bf16.mxu0 0
  %512 = vmatpush1.bf16.msra.mxu0 0
  %513 = vmatprep.subr.bf16.mxu0 0
  %514 = vmatpush1.bf16.msra.mxu0 0
  %515 = vmatprep.subr.bf16.mxu0 0
  %516 = vmatpush1.bf16.msra.mxu0 0
  %517 = vmatprep.subr.bf16.mxu0 0
  %518 = vmatpush1.bf16.msra.mxu0 0
  %519 = vmatprep.subr.bf16.mxu0 0
  %520 = vmatpush1.bf16.msra.mxu0 0
  %521 = vmatprep.subr.bf16.mxu0 0
  %522 = vmatpush1.bf16.msra.mxu0 0
  %523 = vmatprep.subr.bf16.mxu0 0
  %524 = vmatpush1.bf16.msra.mxu0 0
  %525 = vmatprep.subr.bf16.mxu0 0
  %526 = vmatpush1.bf16.msra.mxu0 0
  %527 = vmatprep.mubr.bf16.mxu0 0
  %528 = vmatmul.mubr.bf16.gmra.mrb[0].mxu0 %v437
  %v529 = vpop.f32.mrb[0].mxu0
  %v530 = vadd.f32 %v408, %v529
  %v531 = vpop.f32.mrb[0].mxu0
  %v532 = vadd.f32 %v408, %v531
  %v533 = vpop.f32.mrb[0].mxu0
  %v534 = vadd.f32 %v413, %v533
  %v535 = vpop.f32.mrb[0].mxu0
  %v536 = vadd.f32 %v413, %v535
  %537 = vmatprep.mubr.bf16.mxu0 0
  %538 = vmatmul.mubr.bf16.gmra.mrb[0].mxu0 %v440
  %v539 = vpop.f32.mrb[0].mxu0
  %v540 = vadd.f32 %v418, %v539
  %v541 = vpop.f32.mrb[0].mxu0
  %v542 = vadd.f32 %v418, %v541
  %v543 = vpop.f32.mrb[0].mxu0
  %v544 = vadd.f32 %v423, %v543
  %v545 = vpop.f32.mrb[0].mxu0
  %v546 = vadd.f32 %v423, %v545
  %547 = vdwg.mxu0
  %v548 = vmax.f32 %v477, 0.0
  %v549 = vmax.f32 %v479, 0.0
  %v550 = vmax.f32 %v530, 0.0
  %v551 = vmax.f32 %v532, 0.0
  %v552 = vmax.f32 %v481, 0.0
  %v553 = vmax.f32 %v483, 0.0
  %v554 = vmax.f32 %v534, 0.0
  %v555 = vmax.f32 %v536, 0.0
  %v556 = vmax.f32 %v487, 0.0
  %v557 = vmax.f32 %v489, 0.0
  %v558 = vmax.f32 %v540, 0.0
  %v559 = vmax.f32 %v542, 0.0
  %v560 = vmax.f32 %v491, 0.0
  %v561 = vmax.f32 %v493, 0.0
  %v562 = vmax.f32 %v544, 0.0
  %v563 = vmax.f32 %v546, 0.0
  %v564 = vpack.c.bf16 %v552, %v548
  %v565 = vpack.c.bf16 %v553, %v549
  %v566 = vpack.c.bf16 %v554, %v550
  %v567 = vpack.c.bf16 %v555, %v551
  %v568 = vpack.c.bf16 %v560, %v556
  %v569 = vpack.c.bf16 %v561, %v557
  %v570 = vpack.c.bf16 %v562, %v558
  %v571 = vpack.c.bf16 %v563, %v559
  %573 = vset.pattern.permute.xlu0 0
  %574 = vperm.xlu0 %573, %v132
  %v575 = vpop.permute.xlu0 %574
  %578 = vset.pattern.permute.xlu0 0
  %579 = vperm.xlu0 %578, %v133
  %v580 = vpop.permute.xlu0 %579
  %583 = vset.pattern.permute.xlu0 0
  %584 = vperm.xlu0 %583, %v134
  %v585 = vpop.permute.xlu0 %584
  %588 = vset.pattern.permute.xlu0 0
  %589 = vperm.xlu0 %588, %v135
  %v590 = vpop.permute.xlu0 %589
  %v596 = vunpack.c.l.b16 %v118
  %v597 = vunpack.c.l.b16 %v119
  %v598 = vunpack.c.l.b16 %v120
  %v599 = vunpack.c.l.b16 %v121
  %v600 = vpack.c.b16 %v597, %v596
  %v601 = vpack.c.b16 %v599, %v598
  %v603 = vsel %vm435, %v600, 0
  %v606 = vsel %vm435, %v601, 0
  %608 = vmatprep.subr.bf16.mxu0 %v565
  %609 = vmatpush1.bf16.msra.mxu0 %v564
  %610 = vmatprep.subr.bf16.mxu0 %v569
  %611 = vmatpush1.bf16.msra.mxu0 %v568
  %612 = vmatprep.subr.bf16.mxu0 0
  %613 = vmatpush1.bf16.msra.mxu0 0
  %614 = vmatprep.subr.bf16.mxu0 0
  %615 = vmatpush1.bf16.msra.mxu0 0
  %616 = vmatprep.subr.bf16.mxu0 0
  %617 = vmatpush1.bf16.msra.mxu0 0
  %618 = vmatprep.subr.bf16.mxu0 0
  %619 = vmatpush1.bf16.msra.mxu0 0
  %620 = vmatprep.subr.bf16.mxu0 0
  %621 = vmatpush1.bf16.msra.mxu0 0
  %622 = vmatprep.subr.bf16.mxu0 0
  %623 = vmatpush1.bf16.msra.mxu0 0
  %624 = vmatprep.subr.bf16.mxu0 0
  %625 = vmatpush1.bf16.msra.mxu0 0
  %626 = vmatprep.subr.bf16.mxu0 0
  %627 = vmatpush1.bf16.msra.mxu0 0
  %628 = vmatprep.subr.bf16.mxu0 0
  %629 = vmatpush1.bf16.msra.mxu0 0
  %630 = vmatprep.subr.bf16.mxu0 0
  %631 = vmatpush1.bf16.msra.mxu0 0
  %632 = vmatprep.subr.bf16.mxu0 0
  %633 = vmatpush1.bf16.msra.mxu0 0
  %634 = vmatprep.subr.bf16.mxu0 0
  %635 = vmatpush1.bf16.msra.mxu0 0
  %636 = vmatprep.subr.bf16.mxu0 0
  %637 = vmatpush1.bf16.msra.mxu0 0
  %638 = vmatprep.subr.bf16.mxu0 0
  %639 = vmatpush1.bf16.msra.mxu0 0
  %640 = vmatprep.mubr.bf16.mxu0 0
  %641 = vmatmul.mubr.bf16.gmra.mrb[0].mxu0 %v603
  %v642 = vpop.f32.mrb[0].mxu0
  %v643 = vadd.f32 %v575, %v642
  %v644 = vpop.f32.mrb[0].mxu0
  %v645 = vadd.f32 %v575, %v644
  %v646 = vpop.f32.mrb[0].mxu0
  %v647 = vadd.f32 %v580, %v646
  %v648 = vpop.f32.mrb[0].mxu0
  %v649 = vadd.f32 %v580, %v648
  %650 = vmatprep.mubr.bf16.mxu0 0
  %651 = vmatmul.mubr.bf16.gmra.mrb[0].mxu0 %v606
  %v652 = vpop.f32.mrb[0].mxu0
  %v653 = vadd.f32 %v585, %v652
  %v654 = vpop.f32.mrb[0].mxu0
  %v655 = vadd.f32 %v585, %v654
  %v656 = vpop.f32.mrb[0].mxu0
  %v657 = vadd.f32 %v590, %v656
  %v658 = vpop.f32.mrb[0].mxu0
  %v659 = vadd.f32 %v590, %v658
  %660 = vdwg.mxu0
  %661 = vmatprep.subr.bf16.mxu0 %v567
  %662 = vmatpush1.bf16.msra.mxu0 %v566
  %663 = vmatprep.subr.bf16.mxu0 %v571
  %664 = vmatpush1.bf16.msra.mxu0 %v570
  %665 = vmatprep.subr.bf16.mxu0 0
  %666 = vmatpush1.bf16.msra.mxu0 0
  %667 = vmatprep.subr.bf16.mxu0 0
  %668 = vmatpush1.bf16.msra.mxu0 0
  %669 = vmatprep.subr.bf16.mxu0 0
  %670 = vmatpush1.bf16.msra.mxu0 0
  %671 = vmatprep.subr.bf16.mxu0 0
  %672 = vmatpush1.bf16.msra.mxu0 0
  %673 = vmatprep.subr.bf16.mxu0 0
  %674 = vmatpush1.bf16.msra.mxu0 0
  %675 = vmatprep.subr.bf16.mxu0 0
  %676 = vmatpush1.bf16.msra.mxu0 0
  %677 = vmatprep.subr.bf16.mxu0 0
  %678 = vmatpush1.bf16.msra.mxu0 0
  %679 = vmatprep.subr.bf16.mxu0 0
  %680 = vmatpush1.bf16.msra.mxu0 0
  %681 = vmatprep.subr.bf16.mxu0 0
  %682 = vmatpush1.bf16.msra.mxu0 0
  %683 = vmatprep.subr.bf16.mxu0 0
  %684 = vmatpush1.bf16.msra.mxu0 0
  %685 = vmatprep.subr.bf16.mxu0 0
  %686 = vmatpush1.bf16.msra.mxu0 0
  %687 = vmatprep.subr.bf16.mxu0 0
  %688 = vmatpush1.bf16.msra.mxu0 0
  %689 = vmatprep.subr.bf16.mxu0 0
  %690 = vmatpush1.bf16.msra.mxu0 0
  %691 = vmatprep.subr.bf16.mxu0 0
  %692 = vmatpush1.bf16.msra.mxu0 0
  %693 = vmatprep.mubr.bf16.mxu0 0
  %694 = vmatmul.mubr.bf16.gmra.mrb[0].mxu0 %v603
  %v695 = vpop.f32.mrb[0].mxu0
  %v696 = vadd.f32 %v575, %v695
  %v697 = vpop.f32.mrb[0].mxu0
  %v698 = vadd.f32 %v575, %v697
  %v699 = vpop.f32.mrb[0].mxu0
  %v700 = vadd.f32 %v580, %v699
  %v701 = vpop.f32.mrb[0].mxu0
  %v702 = vadd.f32 %v580, %v701
  %703 = vmatprep.mubr.bf16.mxu0 0
  %704 = vmatmul.mubr.bf16.gmra.mrb[0].mxu0 %v606
  %v705 = vpop.f32.mrb[0].mxu0
  %v706 = vadd.f32 %v585, %v705
  %v707 = vpop.f32.mrb[0].mxu0
  %v708 = vadd.f32 %v585, %v707
  %v709 = vpop.f32.mrb[0].mxu0
  %v710 = vadd.f32 %v590, %v709
  %v711 = vpop.f32.mrb[0].mxu0
  %v712 = vadd.f32 %v590, %v711
  %713 = vdwg.mxu0
  %v714 = vmax.f32 %v643, 0.0
  %v715 = vmax.f32 %v645, 0.0
  %v716 = vmax.f32 %v696, 0.0
  %v717 = vmax.f32 %v698, 0.0
  %v718 = vmax.f32 %v647, 0.0
  %v719 = vmax.f32 %v649, 0.0
  %v720 = vmax.f32 %v700, 0.0
  %v721 = vmax.f32 %v702, 0.0
  %v722 = vmax.f32 %v653, 0.0
  %v723 = vmax.f32 %v655, 0.0
  %v724 = vmax.f32 %v706, 0.0
  %v725 = vmax.f32 %v708, 0.0
  %v726 = vmax.f32 %v657, 0.0
  %v727 = vmax.f32 %v659, 0.0
  %v728 = vmax.f32 %v710, 0.0
  %v729 = vmax.f32 %v712, 0.0
  %v730 = vpack.c.bf16 %v718, %v714
  %v731 = vpack.c.bf16 %v719, %v715
  %v732 = vpack.c.bf16 %v720, %v716
  %v733 = vpack.c.bf16 %v721, %v717
  %v734 = vpack.c.bf16 %v726, %v722
  %v735 = vpack.c.bf16 %v727, %v723
  %v736 = vpack.c.bf16 %v728, %v724
  %v737 = vpack.c.bf16 %v729, %v725
  %739 = vset.pattern.permute.xlu0 0
  %740 = vperm.xlu0 %739, %v136
  %v741 = vpop.permute.xlu0 %740
  %744 = vset.pattern.permute.xlu0 0
  %745 = vperm.xlu0 %744, %v137
  %v746 = vpop.permute.xlu0 %745
  %v750 = vunpack.c.l.b16 %v122
  %v751 = vunpack.c.l.b16 %v123
  %v752 = vpack.c.b16 %v751, %v750
  %v754 = vsel %vm435, %v752, 0
  %756 = vmatprep.subr.bf16.mxu0 %v731
  %757 = vmatpush1.bf16.msra.mxu0 %v730
  %758 = vmatprep.subr.bf16.mxu0 %v735
  %759 = vmatpush1.bf16.msra.mxu0 %v734
  %760 = vmatprep.subr.bf16.mxu0 0
  %761 = vmatpush1.bf16.msra.mxu0 0
  %762 = vmatprep.subr.bf16.mxu0 0
  %763 = vmatpush1.bf16.msra.mxu0 0
  %764 = vmatprep.subr.bf16.mxu0 0
  %765 = vmatpush1.bf16.msra.mxu0 0
  %766 = vmatprep.subr.bf16.mxu0 0
  %767 = vmatpush1.bf16.msra.mxu0 0
  %768 = vmatprep.subr.bf16.mxu0 0
  %769 = vmatpush1.bf16.msra.mxu0 0
  %770 = vmatprep.subr.bf16.mxu0 0
  %771 = vmatpush1.bf16.msra.mxu0 0
  %772 = vmatprep.subr.bf16.mxu0 0
  %773 = vmatpush1.bf16.msra.mxu0 0
  %774 = vmatprep.subr.bf16.mxu0 0
  %775 = vmatpush1.bf16.msra.mxu0 0
  %776 = vmatprep.subr.bf16.mxu0 0
  %777 = vmatpush1.bf16.msra.mxu0 0
  %778 = vmatprep.subr.bf16.mxu0 0
  %779 = vmatpush1.bf16.msra.mxu0 0
  %780 = vmatprep.subr.bf16.mxu0 0
  %781 = vmatpush1.bf16.msra.mxu0 0
  %782 = vmatprep.subr.bf16.mxu0 0
  %783 = vmatpush1.bf16.msra.mxu0 0
  %784 = vmatprep.subr.bf16.mxu0 0
  %785 = vmatpush1.bf16.msra.mxu0 0
  %786 = vmatprep.subr.bf16.mxu0 0
  %787 = vmatpush1.bf16.msra.mxu0 0
  %788 = vmatprep.mubr.bf16.mxu0 0
  %789 = vmatmul.mubr.bf16.gmra.mrb[0].mxu0 %v754
  %v790 = vpop.f32.mrb[0].mxu0
  %v791 = vadd.f32 %v741, %v790
  %v792 = vpop.f32.mrb[0].mxu0
  %v793 = vadd.f32 %v741, %v792
  %v794 = vpop.f32.mrb[0].mxu0
  %v795 = vadd.f32 %v746, %v794
  %v796 = vpop.f32.mrb[0].mxu0
  %v797 = vadd.f32 %v746, %v796
  %798 = vdwg.mxu0
  %799 = vmatprep.subr.bf16.mxu0 %v733
  %800 = vmatpush1.bf16.msra.mxu0 %v732
  %801 = vmatprep.subr.bf16.mxu0 %v737
  %802 = vmatpush1.bf16.msra.mxu0 %v736
  %803 = vmatprep.subr.bf16.mxu0 0
  %804 = vmatpush1.bf16.msra.mxu0 0
  %805 = vmatprep.subr.bf16.mxu0 0
  %806 = vmatpush1.bf16.msra.mxu0 0
  %807 = vmatprep.subr.bf16.mxu0 0
  %808 = vmatpush1.bf16.msra.mxu0 0
  %809 = vmatprep.subr.bf16.mxu0 0
  %810 = vmatpush1.bf16.msra.mxu0 0
  %811 = vmatprep.subr.bf16.mxu0 0
  %812 = vmatpush1.bf16.msra.mxu0 0
  %813 = vmatprep.subr.bf16.mxu0 0
  %814 = vmatpush1.bf16.msra.mxu0 0
  %815 = vmatprep.subr.bf16.mxu0 0
  %816 = vmatpush1.bf16.msra.mxu0 0
  %817 = vmatprep.subr.bf16.mxu0 0
  %818 = vmatpush1.bf16.msra.mxu0 0
  %819 = vmatprep.subr.bf16.mxu0 0
  %820 = vmatpush1.bf16.msra.mxu0 0
  %821 = vmatprep.subr.bf16.mxu0 0
  %822 = vmatpush1.bf16.msra.mxu0 0
  %823 = vmatprep.subr.bf16.mxu0 0
  %824 = vmatpush1.bf16.msra.mxu0 0
  %825 = vmatprep.subr.bf16.mxu0 0
  %826 = vmatpush1.bf16.msra.mxu0 0
  %827 = vmatprep.subr.bf16.mxu0 0
  %828 = vmatpush1.bf16.msra.mxu0 0
  %829 = vmatprep.subr.bf16.mxu0 0
  %830 = vmatpush1.bf16.msra.mxu0 0
  %831 = vmatprep.mubr.bf16.mxu0 0
  %832 = vmatmul.mubr.bf16.gmra.mrb[0].mxu0 %v754
  %v833 = vpop.f32.mrb[0].mxu0
  %v834 = vadd.f32 %v741, %v833
  %v835 = vpop.f32.mrb[0].mxu0
  %v836 = vadd.f32 %v741, %v835
  %v837 = vpop.f32.mrb[0].mxu0
  %v838 = vadd.f32 %v746, %v837
  %v839 = vpop.f32.mrb[0].mxu0
  %v840 = vadd.f32 %v746, %v839
  %841 = vdwg.mxu0
  %842 = vxpose.xlu0.b32.start [1/16] %v791, 128
  %843 = vxpose.xlu0.b32.cont [2/16] %v795, 128
  %844 = vxpose.xlu0.b32.cont [3/16] 0.0, 128
  %845 = vxpose.xlu0.b32.cont [4/16] 0.0, 128
  %846 = vxpose.xlu0.b32.cont [5/16] 0.0, 128
  %847 = vxpose.xlu0.b32.cont [6/16] 0.0, 128
  %848 = vxpose.xlu0.b32.cont [7/16] 0.0, 128
  %849 = vxpose.xlu0.b32.cont [8/16] 0.0, 128
  %850 = vxpose.xlu0.b32.cont [9/16] 0.0, 128
  %851 = vxpose.xlu0.b32.cont [10/16] 0.0, 128
  %852 = vxpose.xlu0.b32.cont [11/16] 0.0, 128
  %853 = vxpose.xlu0.b32.cont [12/16] 0.0, 128
  %854 = vxpose.xlu0.b32.cont [13/16] 0.0, 128
  %855 = vxpose.xlu0.b32.cont [14/16] 0.0, 128
  %856 = vxpose.xlu0.b32.cont [15/16] 0.0, 128
  %857 = vxpose.xlu0.b32.end [16/16] 0.0, 128
  %v858 = vpop.trf.xlu0
  %v859 = vpop.trf.xlu0
  %v860 = vpop.trf.xlu0
  %v861 = vpop.trf.xlu0
  %v862 = vpop.trf.xlu0
  %v863 = vpop.trf.xlu0
  %v864 = vpop.trf.xlu0
  %v865 = vpop.trf.xlu0
  %v866 = vpop.trf.xlu0
  %v867 = vpop.trf.xlu0
  %v868 = vpop.trf.xlu0
  %v869 = vpop.trf.xlu0
  %v870 = vpop.trf.xlu0
  %v871 = vpop.trf.xlu0
  %v872 = vpop.trf.xlu0
  %v873 = vpop.trf.xlu0
  %874 = vxpose.xlu0.b32.start [1/16] %v793, 128
  %875 = vxpose.xlu0.b32.cont [2/16] %v797, 128
  %876 = vxpose.xlu0.b32.cont [3/16] 0.0, 128
  %877 = vxpose.xlu0.b32.cont [4/16] 0.0, 128
  %878 = vxpose.xlu0.b32.cont [5/16] 0.0, 128
  %879 = vxpose.xlu0.b32.cont [6/16] 0.0, 128
  %880 = vxpose.xlu0.b32.cont [7/16] 0.0, 128
  %881 = vxpose.xlu0.b32.cont [8/16] 0.0, 128
  %882 = vxpose.xlu0.b32.cont [9/16] 0.0, 128
  %883 = vxpose.xlu0.b32.cont [10/16] 0.0, 128
  %884 = vxpose.xlu0.b32.cont [11/16] 0.0, 128
  %885 = vxpose.xlu0.b32.cont [12/16] 0.0, 128
  %886 = vxpose.xlu0.b32.cont [13/16] 0.0, 128
  %887 = vxpose.xlu0.b32.cont [14/16] 0.0, 128
  %888 = vxpose.xlu0.b32.cont [15/16] 0.0, 128
  %889 = vxpose.xlu0.b32.end [16/16] 0.0, 128
  %v890 = vpop.trf.xlu0
  %v891 = vpop.trf.xlu0
  %v892 = vpop.trf.xlu0
  %v893 = vpop.trf.xlu0
  %v894 = vpop.trf.xlu0
  %v895 = vpop.trf.xlu0
  %v896 = vpop.trf.xlu0
  %v897 = vpop.trf.xlu0
  %v898 = vpop.trf.xlu0
  %v899 = vpop.trf.xlu0
  %v900 = vpop.trf.xlu0
  %v901 = vpop.trf.xlu0
  %v902 = vpop.trf.xlu0
  %v903 = vpop.trf.xlu0
  %v904 = vpop.trf.xlu0
  %v905 = vpop.trf.xlu0
  %906 = vxpose.xlu0.b32.start [1/16] %v834, 128
  %907 = vxpose.xlu0.b32.cont [2/16] %v838, 128
  %908 = vxpose.xlu0.b32.cont [3/16] 0.0, 128
  %909 = vxpose.xlu0.b32.cont [4/16] 0.0, 128
  %910 = vxpose.xlu0.b32.cont [5/16] 0.0, 128
  %911 = vxpose.xlu0.b32.cont [6/16] 0.0, 128
  %912 = vxpose.xlu0.b32.cont [7/16] 0.0, 128
  %913 = vxpose.xlu0.b32.cont [8/16] 0.0, 128
  %914 = vxpose.xlu0.b32.cont [9/16] 0.0, 128
  %915 = vxpose.xlu0.b32.cont [10/16] 0.0, 128
  %916 = vxpose.xlu0.b32.cont [11/16] 0.0, 128
  %917 = vxpose.xlu0.b32.cont [12/16] 0.0, 128
  %918 = vxpose.xlu0.b32.cont [13/16] 0.0, 128
  %919 = vxpose.xlu0.b32.cont [14/16] 0.0, 128
  %920 = vxpose.xlu0.b32.cont [15/16] 0.0, 128
  %921 = vxpose.xlu0.b32.end [16/16] 0.0, 128
  %v922 = vpop.trf.xlu0
  %v923 = vpop.trf.xlu0
  %v924 = vpop.trf.xlu0
  %v925 = vpop.trf.xlu0
  %v926 = vpop.trf.xlu0
  %v927 = vpop.trf.xlu0
  %v928 = vpop.trf.xlu0
  %v929 = vpop.trf.xlu0
  %v930 = vpop.trf.xlu0
  %v931 = vpop.trf.xlu0
  %v932 = vpop.trf.xlu0
  %v933 = vpop.trf.xlu0
  %v934 = vpop.trf.xlu0
  %v935 = vpop.trf.xlu0
  %v936 = vpop.trf.xlu0
  %v937 = vpop.trf.xlu0
  %938 = vxpose.xlu0.b32.start [1/16] %v836, 128
  %939 = vxpose.xlu0.b32.cont [2/16] %v840, 128
  %940 = vxpose.xlu0.b32.cont [3/16] 0.0, 128
  %941 = vxpose.xlu0.b32.cont [4/16] 0.0, 128
  %942 = vxpose.xlu0.b32.cont [5/16] 0.0, 128
  %943 = vxpose.xlu0.b32.cont [6/16] 0.0, 128
  %944 = vxpose.xlu0.b32.cont [7/16] 0.0, 128
  %945 = vxpose.xlu0.b32.cont [8/16] 0.0, 128
  %946 = vxpose.xlu0.b32.cont [9/16] 0.0, 128
  %947 = vxpose.xlu0.b32.cont [10/16] 0.0, 128
  %948 = vxpose.xlu0.b32.cont [11/16] 0.0, 128
  %949 = vxpose.xlu0.b32.cont [12/16] 0.0, 128
  %950 = vxpose.xlu0.b32.cont [13/16] 0.0, 128
  %951 = vxpose.xlu0.b32.cont [14/16] 0.0, 128
  %952 = vxpose.xlu0.b32.cont [15/16] 0.0, 128
  %953 = vxpose.xlu0.b32.end [16/16] 0.0, 128
  %v954 = vpop.trf.xlu0
  %v955 = vpop.trf.xlu0
  %v956 = vpop.trf.xlu0
  %v957 = vpop.trf.xlu0
  %v958 = vpop.trf.xlu0
  %v959 = vpop.trf.xlu0
  %v960 = vpop.trf.xlu0
  %v961 = vpop.trf.xlu0
  %v962 = vpop.trf.xlu0
  %v963 = vpop.trf.xlu0
  %v964 = vpop.trf.xlu0
  %v965 = vpop.trf.xlu0
  %v966 = vpop.trf.xlu0
  %v967 = vpop.trf.xlu0
  %v968 = vpop.trf.xlu0
  %v969 = vpop.trf.xlu0
  %vm970 = vcmask 130048
  %971 = vst.msk [vmem:[%s4] sm:$0xff] %vm970, %v858
  %972 = vst.msk [vmem:[%s4 + $0x8] sm:$0xff] %vm970, %v859
  %973 = vst.msk [vmem:[%s4 + $0x10] sm:$0xff] %vm970, %v860
  %974 = vst.msk [vmem:[%s4 + $0x18] sm:$0xff] %vm970, %v861
  %975 = vst.msk [vmem:[%s4 + $0x20] sm:$0xff] %vm970, %v862
  %976 = vst.msk [vmem:[%s4 + $0x28] sm:$0xff] %vm970, %v863
  %977 = vst.msk [vmem:[%s4 + $0x30] sm:$0xff] %vm970, %v864
  %978 = vst.msk [vmem:[%s4 + $0x38] sm:$0xff] %vm970, %v865
  %979 = vst.msk [vmem:[%s4 + $0x40] sm:$0xff] %vm970, %v866
  %980 = vst.msk [vmem:[%s4 + $0x48] sm:$0xff] %vm970, %v867
  %981 = vst.msk [vmem:[%s4 + $0x50] sm:$0xff] %vm970, %v868
  %982 = vst.msk [vmem:[%s4 + $0x58] sm:$0xff] %vm970, %v869
  %983 = vst.msk [vmem:[%s4 + $0x60] sm:$0xff] %vm970, %v870
  %984 = vst.msk [vmem:[%s4 + $0x68] sm:$0xff] %vm970, %v871
  %985 = vst.msk [vmem:[%s4 + $0x70] sm:$0xff] %vm970, %v872
  %986 = vst.msk [vmem:[%s4 + $0x78] sm:$0xff] %vm970, %v873
  %987 = vst.msk [vmem:[%s4 + $0x80] sm:$0xff] %vm970, %v890
  %988 = vst.msk [vmem:[%s4 + $0x88] sm:$0xff] %vm970, %v891
  %989 = vst.msk [vmem:[%s4 + $0x90] sm:$0xff] %vm970, %v892
  %990 = vst.msk [vmem:[%s4 + $0x98] sm:$0xff] %vm970, %v893
  %991 = vst.msk [vmem:[%s4 + $0xa0] sm:$0xff] %vm970, %v894
  %992 = vst.msk [vmem:[%s4 + $0xa8] sm:$0xff] %vm970, %v895
  %993 = vst.msk [vmem:[%s4 + $0xb0] sm:$0xff] %vm970, %v896
  %994 = vst.msk [vmem:[%s4 + $0xb8] sm:$0xff] %vm970, %v897
  %995 = vst.msk [vmem:[%s4 + $0xc0] sm:$0xff] %vm970, %v898
  %996 = vst.msk [vmem:[%s4 + $0xc8] sm:$0xff] %vm970, %v899
  %997 = vst.msk [vmem:[%s4 + $0xd0] sm:$0xff] %vm970, %v900
  %998 = vst.msk [vmem:[%s4 + $0xd8] sm:$0xff] %vm970, %v901
  %999 = vst.msk [vmem:[%s4 + $0xe0] sm:$0xff] %vm970, %v902
  %1000 = vst.msk [vmem:[%s4 + $0xe8] sm:$0xff] %vm970, %v903
  %1001 = vst.msk [vmem:[%s4 + $0xf0] sm:$0xff] %vm970, %v904
  %1002 = vst.msk [vmem:[%s4 + $0xf8] sm:$0xff] %vm970, %v905
  %1003 = vst.msk [vmem:[%s4 + $0x100] sm:$0xff] %vm970, %v922
  %1004 = vst.msk [vmem:[%s4 + $0x108] sm:$0xff] %vm970, %v923
  %1005 = vst.msk [vmem:[%s4 + $0x110] sm:$0xff] %vm970, %v924
  %1006 = vst.msk [vmem:[%s4 + $0x118] sm:$0xff] %vm970, %v925
  %1007 = vst.msk [vmem:[%s4 + $0x120] sm:$0xff] %vm970, %v926
  %1008 = vst.msk [vmem:[%s4 + $0x128] sm:$0xff] %vm970, %v927
  %1009 = vst.msk [vmem:[%s4 + $0x130] sm:$0xff] %vm970, %v928
  %1010 = vst.msk [vmem:[%s4 + $0x138] sm:$0xff] %vm970, %v929
  %1011 = vst.msk [vmem:[%s4 + $0x140] sm:$0xff] %vm970, %v930
  %1012 = vst.msk [vmem:[%s4 + $0x148] sm:$0xff] %vm970, %v931
  %1013 = vst.msk [vmem:[%s4 + $0x150] sm:$0xff] %vm970, %v932
  %1014 = vst.msk [vmem:[%s4 + $0x158] sm:$0xff] %vm970, %v933
  %1015 = vst.msk [vmem:[%s4 + $0x160] sm:$0xff] %vm970, %v934
  %1016 = vst.msk [vmem:[%s4 + $0x168] sm:$0xff] %vm970, %v935
  %1017 = vst.msk [vmem:[%s4 + $0x170] sm:$0xff] %vm970, %v936
  %1018 = vst.msk [vmem:[%s4 + $0x178] sm:$0xff] %vm970, %v937
  %1019 = vst.msk [vmem:[%s4 + $0x180] sm:$0xff] %vm970, %v954
  %1020 = vst.msk [vmem:[%s4 + $0x188] sm:$0xff] %vm970, %v955
  %1021 = vst.msk [vmem:[%s4 + $0x190] sm:$0xff] %vm970, %v956
  %1022 = vst.msk [vmem:[%s4 + $0x198] sm:$0xff] %vm970, %v957
  %1023 = vst.msk [vmem:[%s4 + $0x1a0] sm:$0xff] %vm970, %v958
  %1024 = vst.msk [vmem:[%s4 + $0x1a8] sm:$0xff] %vm970, %v959
  %1025 = vst.msk [vmem:[%s4 + $0x1b0] sm:$0xff] %vm970, %v960
  %1026 = vst.msk [vmem:[%s4 + $0x1b8] sm:$0xff] %vm970, %v961
  %1027 = vst.msk [vmem:[%s4 + $0x1c0] sm:$0xff] %vm970, %v962
  %1028 = vst.msk [vmem:[%s4 + $0x1c8] sm:$0xff] %vm970, %v963
  %1029 = vst.msk [vmem:[%s4 + $0x1d0] sm:$0xff] %vm970, %v964
  %1030 = vst.msk [vmem:[%s4 + $0x1d8] sm:$0xff] %vm970, %v965
  %1031 = vst.msk [vmem:[%s4 + $0x1e0] sm:$0xff] %vm970, %v966
  %1032 = vst.msk [vmem:[%s4 + $0x1e8] sm:$0xff] %vm970, %v967
  %1033 = vst.msk [vmem:[%s4 + $0x1f0] sm:$0xff] %vm970, %v968
  %1034 = vst.msk [vmem:[%s4 + $0x1f8] sm:$0xff] %vm970, %v969
  // Predicated region
  $region18: #{becl_forward.1} parent=0 // pred_check
    _
  $region19: #{becl_forward.1} parent=0 // pred_check_branch
    %1036 = sbr.rel (0) target = $region21
  $region20: #{becl_forward.1} parent=0 // pred_region
    _
  $region21: #{becl_forward.1} parent=0 // pred_fallthru
    _
  // Predicated region
  $region22: #{becl_forward.1} parent=0 // pred_check
    _
  $region23: #{becl_forward.1} parent=0 // pred_check_branch
    %1038 = sbr.rel (0) target = $region25
  $region24: #{becl_forward.1} parent=0 // pred_region
    _
  $region25: #{becl_forward.1} parent=0 // pred_fallthru
    _

</llo_original>
